<compile_context>
chip_gen: v6e
topology: v6e:2x2x1
jax: 0.10.0
libtpu: 0.0.40
codegen_flags: <defaults>
</compile_context>

<pallas_src>
import functools
import math

import jax
import jax.numpy as jnp
from jax.experimental import pallas as pl
from jax.experimental.pallas import tpu as pltpu


def _round_up(x, m):
    return (x + m - 1) // m * m


_FAST_PATH_VMEM_BUDGET = 24 * 1024 * 1024   # conservative: leaves headroom on v7x (64 MiB)
_H_CACHE_VMEM_BUDGET = 36 * 1024 * 1024     # h-cache path must fit under this estimate


# -----------------------------------------------------------------------------
# Fast path: whole problem resident in VMEM, single kernel invocation (no grid).
# -----------------------------------------------------------------------------
def _mlp_single_kernel(x_ref, w1_ref, gamma_ref, beta_ref, w2_ref, b2_ref, o_ref,
                       *, n_rows, eps):
    # linear1 (bias-free: per-feature bias before training-mode BN cancels exactly).
    h = jnp.dot(x_ref[...].astype(w1_ref.dtype), w1_ref[...],
                preferred_element_type=jnp.float32)
    inv_n = 1.0 / n_rows                                  # true batch size; padded rows give h == 0
    mean = jnp.sum(h, axis=0, keepdims=True) * inv_n
    var = jnp.sum(h * h, axis=0, keepdims=True) * inv_n - mean * mean
    var = jnp.maximum(var, 0.0)                           # one-pass cancellation guard
    scale = gamma_ref[...] * jax.lax.rsqrt(var + eps)     # folded BN: one mul + one add per elem
    shift = beta_ref[...] - mean * scale
    a = jnp.maximum(h * scale + shift, 0.0)
    out = jnp.dot(a.astype(w2_ref.dtype), w2_ref[...],
                  preferred_element_type=jnp.float32) + b2_ref[...]
    o_ref[...] = out.astype(o_ref.dtype)


# -----------------------------------------------------------------------------
# Tiled path: grid = (phase, row_tile).
#   phase 0: linear1, accumulate per-feature stats, cache h in VMEM (bf16).
#   phase 1: fold BN once (tile 0), apply scale/shift + ReLU, linear2, write out.
# -----------------------------------------------------------------------------
def _mlp_tiled_kernel(x_ref, w1_ref, gamma_ref, beta_ref, w2_ref, b2_ref, o_ref,
                      *scratch, n_rows, eps, use_h_cache):
    if use_h_cache:
        h_cache, sum_ref, sumsq_ref, scale_ref, shift_ref = scratch
    else:
        sum_ref, sumsq_ref, scale_ref, shift_ref = scratch
        h_cache = None

    phase = pl.program_id(0)
    tile = pl.program_id(1)

    def linear1():
        # bf16 MXU operands, f32 accumulation; bias-free (cancels under training BN).
        return jnp.dot(x_ref[...].astype(w1_ref.dtype), w1_ref[...],
                       preferred_element_type=jnp.float32)

    @pl.when((phase == 0) & (tile == 0))
    def _init_stats():
        sum_ref[...] = jnp.zeros_like(sum_ref)
        sumsq_ref[...] = jnp.zeros_like(sumsq_ref)

    @pl.when(phase == 0)
    def _stats():
        h = linear1()
        # (8, c_out) partial accumulators: unmasked, vreg-aligned updates (no masked
        # sub-sublane RMW); collapsed to a single row only once, in the phase-1 fold.
        hp = h.reshape(h.shape[0] // 8, 8, h.shape[1])
        sum_ref[...] += jnp.sum(hp, axis=0)
        sumsq_ref[...] += jnp.sum(hp * hp, axis=0)
        if use_h_cache:
            # Cache h (bf16) so phase 1 skips both the second HBM pass over x and the
            # duplicate linear1 matmul.
            h_cache[tile] = h.astype(h_cache.dtype)

    @pl.when(phase == 1)
    def _apply():
        @pl.when(tile == 0)
        def _fold_bn():
            inv_n = 1.0 / n_rows                          # padded rows contribute h == 0
            mean = jnp.sum(sum_ref[...], axis=0, keepdims=True) * inv_n
            var = jnp.sum(sumsq_ref[...], axis=0, keepdims=True) * inv_n - mean * mean
            var = jnp.maximum(var, 0.0)                   # one-pass cancellation guard
            scale = gamma_ref[...] * jax.lax.rsqrt(var + eps)
            scale_ref[...] = scale
            shift_ref[...] = beta_ref[...] - mean * scale

        h = h_cache[tile].astype(jnp.float32) if use_h_cache else linear1()
        a = jnp.maximum(h * scale_ref[...] + shift_ref[...], 0.0)   # f32 epilogue
        out = jnp.dot(a.astype(w2_ref.dtype), w2_ref[...],
                      preferred_element_type=jnp.float32) + b2_ref[...]
        o_ref[...] = out.astype(o_ref.dtype)


def mlp_forward(x, w1, gamma, beta, w2, b2, *, block_rows=512,
                mxu_dtype=jnp.bfloat16, eps=1e-5,
                force_tiled=False, force_no_h_cache=False):
    n, c_in = x.shape
    c_out = w1.shape[1]
    gamma = gamma.reshape(1, c_out)
    beta = beta.reshape(1, c_out)
    b2 = b2.reshape(1, c_out)

    # bf16 weights: native MXU precision on v6e/v7x, halves resident weight bytes.
    w1m = w1.astype(mxu_dtype)
    w2m = w2.astype(mxu_dtype)

    io_bytes = x.dtype.itemsize
    weight_bytes = ((c_in * c_out + c_out * c_out) * jnp.dtype(mxu_dtype).itemsize
                    + 3 * c_out * 4)

    # ------------------------- single-step fast path --------------------------
    n8 = _round_up(n, 8)
    fast_est = weight_bytes + n8 * (c_in * io_bytes + c_out * io_bytes + 2 * c_out * 4)
    if not force_tiled and fast_est <= _FAST_PATH_VMEM_BUDGET:
        xp = jnp.pad(x, ((0, n8 - n), (0, 0))) if n8 != n else x
        out = pl.pallas_call(
            functools.partial(_mlp_single_kernel, n_rows=n, eps=eps),
            out_shape=jax.ShapeDtypeStruct((n8, c_out), x.dtype),
            compiler_params=pltpu.CompilerParams(
                vmem_limit_bytes=int(min(max(4 * fast_est, 32 << 20), 60 << 20))),
        )(xp, w1m, gamma, beta, w2m, b2)
        return out[:n]

    # --------------------------- tiled two-phase path --------------------------
    # Row tile (multiple of 8 sublanes).  Pad N with zero rows; since the kernel's
    # linear1 has no bias, padded rows produce h == 0 and don't perturb the batch
    # statistics as long as we divide by the true N inside the kernel.
    tn = max(8, min(_round_up(block_rows, 8), _round_up(n, 8)))
    n_pad = _round_up(n, tn)
    xp = jnp.pad(x, ((0, n_pad - n), (0, 0))) if n_pad != n else x
    num_tiles = n_pad // tn

    cache_bytes = num_tiles * tn * c_out * 2                          # bf16 h cache
    tile_io = 2 * tn * c_in * io_bytes + 2 * tn * c_out * io_bytes    # dbl-buffered x/out
    stats_bytes = (2 * 8 + 2) * c_out * 4
    base_est = weight_bytes + tile_io + stats_bytes
    use_h_cache = (not force_no_h_cache) and (base_est + cache_bytes <= _H_CACHE_VMEM_BUDGET)
    est = base_est + (cache_bytes if use_h_cache else 0)

    scratch = []
    if use_h_cache:
        scratch.append(pltpu.VMEM((num_tiles, tn, c_out), jnp.bfloat16))  # h cache
    scratch += [pltpu.VMEM((8, c_out), jnp.float32),    # sum(h) partials
                pltpu.VMEM((8, c_out), jnp.float32),    # sum(h*h) partials
                pltpu.VMEM((1, c_out), jnp.float32),    # folded BN scale
                pltpu.VMEM((1, c_out), jnp.float32)]    # folded BN shift

    # With the h cache, x is not needed in phase 1: pin its block index to 0 so the
    # DMA is not re-issued per tile.  Without the cache, phase 1 re-reads x.
    if use_h_cache:
        x_map = lambda p, i: ((1 - p) * i, 0)
    else:
        x_map = lambda p, i: (i, 0)

    kernel = functools.partial(_mlp_tiled_kernel, n_rows=n, eps=eps,
                               use_h_cache=use_h_cache)

    # TODO(synk): for c_out >= ~2-4K, add an output-column grid axis tiling w2's N
    # dimension instead of keeping the (c_out, c_out) block VMEM-resident.
    out = pl.pallas_call(
        kernel,
        out_shape=jax.ShapeDtypeStruct((n_pad, c_out), x.dtype),
        grid_spec=pltpu.PrefetchScalarGridSpec(
            num_scalar_prefetch=0,
            grid=(2, num_tiles),          # (phase, row tile); row tile iterates fastest
            in_specs=[
                pl.BlockSpec((tn, c_in), x_map),                     # x tile
                pl.BlockSpec((c_in, c_out), lambda p, i: (0, 0)),    # w1: VMEM resident
                pl.BlockSpec((1, c_out), lambda p, i: (0, 0)),       # gamma
                pl.BlockSpec((1, c_out), lambda p, i: (0, 0)),       # beta
                pl.BlockSpec((c_out, c_out), lambda p, i: (0, 0)),   # w2: VMEM resident
                pl.BlockSpec((1, c_out), lambda p, i: (0, 0)),       # b2
            ],
            # (p*i, 0): all phase-0 steps + phase-1 tile 0 share output block (0, 0),
            # so each HBM output tile is written back exactly once, lane-dense, with
            # phase-1 data.  Safe only with this grid order and "arbitrary" semantics.
            out_specs=pl.BlockSpec((tn, c_out), lambda p, i: (p * i, 0)),
            scratch_shapes=scratch,
        ),
        compiler_params=pltpu.CompilerParams(
            # Both axes carry the cross-iteration stats / h-cache dependency.
            # TODO(synk): on v7x (2 TCs) restructure into a "parallel" partial-stats
            # kernel + "parallel" apply kernel (or core_map + CMEM reduction) so both
            # TensorCores participate; a single "arbitrary" grid runs on one core.
            dimension_semantics=("arbitrary", "arbitrary"),
            vmem_limit_bytes=int(min(max(2 * est, 32 << 20), 60 << 20)),
        ),
    )(xp, w1m, gamma, beta, w2m, b2)

    return out[:n]


def init_params(key, in_channels, out_channels, dtype=jnp.float32):
    """PyTorch-Linear-style init: U(-1/sqrt(fan_in), 1/sqrt(fan_in)); BN gamma=1, beta=0."""
    k1, k2, k3, k4 = jax.random.split(key, 4)
    bound1 = 1.0 / math.sqrt(in_channels)
    bound2 = 1.0 / math.sqrt(out_channels)
    w1 = jax.random.uniform(k1, (in_channels, out_channels), dtype, -bound1, bound1)
    b1 = jax.random.uniform(k2, (1, out_channels), dtype, -bound1, bound1)
    w2 = jax.random.uniform(k3, (out_channels, out_channels), dtype, -bound2, bound2)
    b2 = jax.random.uniform(k4, (1, out_channels), dtype, -bound2, bound2)
    gamma = jnp.ones((1, out_channels), dtype)   # BatchNorm weight
    beta = jnp.zeros((1, out_channels), dtype)   # BatchNorm bias
    return w1, b1, gamma, beta, w2, b2


def mlp_reference(x, w1, b1, gamma, beta, w2, b2, *, mxu_dtype=jnp.bfloat16, eps=1e-5):
    """Textbook formulation (keeps b1, two-pass BN) with the same bf16 matmul operands.

    Proves the kernel's algebraic simplifications (dropping b1 under training-mode BN,
    one-pass folded scale/shift) are numerically equivalent.
    """
    h = jnp.dot(x.astype(mxu_dtype), w1.astype(mxu_dtype),
                preferred_element_type=jnp.float32) + b1
    mean = jnp.mean(h, axis=0, keepdims=True)
    var = jnp.mean((h - mean) ** 2, axis=0, keepdims=True)
    hn = (h - mean) * jax.lax.rsqrt(var + eps) * gamma + beta
    a = jnp.maximum(hn, 0.0)
    return jnp.dot(a.astype(mxu_dtype), w2.astype(mxu_dtype),
                   preferred_element_type=jnp.float32) + b2


if __name__ == "__main__":
    key = jax.random.PRNGKey(0)
    k_x, k_p = jax.random.split(key)

    batch = 200          # deliberately NOT a multiple of the row tile (exercises padding)
    in_channels = 32
    out_channels = 128

    x = jax.random.normal(k_x, (batch, in_channels), jnp.float32)
    w1, b1, gamma, beta, w2, b2 = init_params(k_p, in_channels, out_channels)

    ref = mlp_reference(x, w1, b1, gamma, beta, w2, b2)

    # 1) single-step fast path (whole problem VMEM-resident, no grid)
    out_fast = jax.block_until_ready(mlp_forward(x, w1, gamma, beta, w2, b2))
    # 2) tiled two-phase path with the VMEM h cache
    out_tiled = jax.block_until_ready(
        mlp_forward(x, w1, gamma, beta, w2, b2, block_rows=64, force_tiled=True))
    # 3) tiled fallback that recomputes linear1 (h cache disabled)
    out_nocache = jax.block_until_ready(
        mlp_forward(x, w1, gamma, beta, w2, b2, block_rows=64, force_tiled=True,
                    force_no_h_cache=True))

    for name, out in (("fast", out_fast), ("tiled_cache", out_tiled),
                      ("tiled_nocache", out_nocache)):
        assert out.shape == (batch, out_channels), f"{name}: bad shape {out.shape}"
        max_diff = jnp.max(jnp.abs(out - ref))
        assert jnp.allclose(out, ref, atol=1e-2, rtol=1e-2), (
            f"{name}: mismatch vs JAX reference, max abs diff = {max_diff}")

    print("KERNEL_OK")
</pallas_src>

<mosaic_0001>
module attributes {stable_mosaic.version = 11 : i64} {
  func.func @_mlp_single_kernel(%arg0: memref<200x32xf32, #tpu.memory_space<vmem>>, %arg1: memref<32x128xbf16, #tpu.memory_space<vmem>>, %arg2: memref<1x128xf32, #tpu.memory_space<vmem>>, %arg3: memref<1x128xf32, #tpu.memory_space<vmem>>, %arg4: memref<128x128xbf16, #tpu.memory_space<vmem>>, %arg5: memref<1x128xf32, #tpu.memory_space<vmem>>, %arg6: memref<200x128xf32, #tpu.memory_space<vmem>>) attributes {dimension_semantics = [], scalar_prefetch = 0 : i64, scratch_operands = 0 : i64, tpu.core_type = #tpu.core_type<tc>} {
    %c0 = arith.constant 0 : index
    %c0_0 = arith.constant 0 : index
    %0 = vector.load %arg0[%c0, %c0_0] : memref<200x32xf32, #tpu.memory_space<vmem>>, vector<200x32xf32>
    %1 = arith.truncf %0 : vector<200x32xf32> to vector<200x32xbf16>
    %c0_1 = arith.constant 0 : index
    %c0_2 = arith.constant 0 : index
    %2 = vector.load %arg1[%c0_1, %c0_2] : memref<32x128xbf16, #tpu.memory_space<vmem>>, vector<32x128xbf16>
    %cst = arith.constant dense<0.000000e+00> : vector<200x128xf32>
    %3 = tpu.matmul %1, %2, %cst {dimension_numbers = #tpu.dot_dimension_numbers<[1], [0], [0], [1], [0, 0, 1, 1], [], []>} : vector<200x32xbf16>, vector<32x128xbf16>, vector<200x128xf32> -> vector<200x128xf32>
    %cst_3 = arith.constant dense<0.000000e+00> : vector<128xf32>
    %4 = vector.multi_reduction <add>, %3, %cst_3 [0] : vector<200x128xf32> to vector<128xf32>
    %5 = vector.shape_cast %4 : vector<128xf32> to vector<1x128xf32>
    %cst_4 = arith.constant 5.000000e-03 : f32
    %6 = vector.broadcast %cst_4 : f32 to vector<1x128xf32>
    %7 = arith.mulf %5, %6 : vector<1x128xf32>
    %8 = arith.mulf %3, %3 : vector<200x128xf32>
    %cst_5 = arith.constant dense<0.000000e+00> : vector<128xf32>
    %9 = vector.multi_reduction <add>, %8, %cst_5 [0] : vector<200x128xf32> to vector<128xf32>
    %10 = vector.shape_cast %9 : vector<128xf32> to vector<1x128xf32>
    %cst_6 = arith.constant 5.000000e-03 : f32
    %11 = vector.broadcast %cst_6 : f32 to vector<1x128xf32>
    %12 = arith.mulf %10, %11 : vector<1x128xf32>
    %13 = arith.mulf %7, %7 : vector<1x128xf32>
    %14 = arith.subf %12, %13 : vector<1x128xf32>
    %cst_7 = arith.constant 0.000000e+00 : f32
    %15 = vector.broadcast %cst_7 : f32 to vector<1x128xf32>
    %16 = arith.maximumf %14, %15 : vector<1x128xf32>
    %c0_8 = arith.constant 0 : index
    %c0_9 = arith.constant 0 : index
    %17 = vector.load %arg2[%c0_8, %c0_9] : memref<1x128xf32, #tpu.memory_space<vmem>>, vector<1x128xf32>
    %cst_10 = arith.constant 9.99999974E-6 : f32
    %18 = vector.broadcast %cst_10 : f32 to vector<1x128xf32>
    %19 = arith.addf %16, %18 : vector<1x128xf32>
    %20 = math.rsqrt %19 : vector<1x128xf32>
    %21 = arith.mulf %17, %20 : vector<1x128xf32>
    %c0_11 = arith.constant 0 : index
    %c0_12 = arith.constant 0 : index
    %22 = vector.load %arg3[%c0_11, %c0_12] : memref<1x128xf32, #tpu.memory_space<vmem>>, vector<1x128xf32>
    %23 = arith.mulf %7, %21 : vector<1x128xf32>
    %24 = arith.subf %22, %23 : vector<1x128xf32>
    %25 = vector.broadcast %21 : vector<1x128xf32> to vector<200x128xf32>
    %26 = arith.mulf %3, %25 : vector<200x128xf32>
    %27 = vector.broadcast %24 : vector<1x128xf32> to vector<200x128xf32>
    %28 = arith.addf %26, %27 : vector<200x128xf32>
    %cst_13 = arith.constant 0.000000e+00 : f32
    %29 = vector.broadcast %cst_13 : f32 to vector<200x128xf32>
    %30 = arith.maximumf %28, %29 : vector<200x128xf32>
    %31 = arith.truncf %30 : vector<200x128xf32> to vector<200x128xbf16>
    %c0_14 = arith.constant 0 : index
    %c0_15 = arith.constant 0 : index
    %32 = vector.load %arg4[%c0_14, %c0_15] : memref<128x128xbf16, #tpu.memory_space<vmem>>, vector<128x128xbf16>
    %cst_16 = arith.constant dense<0.000000e+00> : vector<200x128xf32>
    %33 = tpu.matmul %31, %32, %cst_16 {dimension_numbers = #tpu.dot_dimension_numbers<[1], [0], [0], [1], [0, 0, 1, 1], [], []>} : vector<200x128xbf16>, vector<128x128xbf16>, vector<200x128xf32> -> vector<200x128xf32>
    %c0_17 = arith.constant 0 : index
    %c0_18 = arith.constant 0 : index
    %34 = vector.load %arg5[%c0_17, %c0_18] : memref<1x128xf32, #tpu.memory_space<vmem>>, vector<1x128xf32>
    %35 = vector.broadcast %34 : vector<1x128xf32> to vector<200x128xf32>
    %36 = arith.addf %33, %35 : vector<200x128xf32>
    %c0_19 = arith.constant 0 : index
    %c0_20 = arith.constant 0 : index
    %37 = vector.load %arg6[%c0_19, %c0_20] : memref<200x128xf32, #tpu.memory_space<vmem>>, vector<200x128xf32>
    tpu.vector_store %arg6[%c0_19, %c0_20], %36 {strides = array<i32>} : memref<200x128xf32, #tpu.memory_space<vmem>>, vector<200x128xf32>,
    return
  }
}

</mosaic_0001>

<llo_original>
// kernel: tpu_custom_call.1
$region0: #{tpu_custom_call.1}
  #allocation0 [shape = 'u32[]', space=smem, size = 0x4, offset = 0x4, fixed_abs, tag = 'smem constant byte address 0x4 - core index']
  #allocation1 [shape = 'u32[144,128]{1,0:T(1,128)}', space=vmem, size = 0x12000, scoped, tag = 'internal scratch']
  %s0 = inlined_call_operand.vmem [shape: f32[200,32], index: 0, kind: input, shape index: {}]
  %s1 = inlined_call_operand.vmem [shape: bf16[32,128], index: 1, kind: input, shape index: {}]
  %s2 = inlined_call_operand.vmem [shape: f32[1,128], index: 2, kind: input, shape index: {}]
  %s3 = inlined_call_operand.vmem [shape: f32[1,128], index: 3, kind: input, shape index: {}]
  %s4 = inlined_call_operand.vmem [shape: bf16[128,128], index: 4, kind: input, shape index: {}]
  %s5 = inlined_call_operand.vmem [shape: f32[1,128], index: 5, kind: input, shape index: {}]
  %s6 = inlined_call_operand.hbm [shape: f32[200,128], index: 6, kind: output, shape index: {}]
  %s7 = sld [smem:[#allocation0]]
  $region34: #{tpu_custom_call.1} parent=0
    _
  %s9 = ssub.s32 1, %s7
  %s10 = scalar_select 0, %s9, %s7
  $region1: #{tpu_custom_call.1} parent=0
    #allocation2 [shape = 'u8[102400]{0}', space=vmem, size = 0x19000, scoped, tag = 'output window, operand 0, single buffered']
    #allocation3 [shape = 's32[1]{0}', space=sflag, size = 0x4, scoped, tag = 'scoped memory for tpu_custom_call.1']
    %11 = vsyncpa [#allocation3], 0
    // Predicated region
    $region2: #{tpu_custom_call.1} parent=1 // pred_check
      _
    $region3: #{tpu_custom_call.1} parent=1 // pred_check_branch
      %13 = sbr.rel (0) target = $region5
    $region4: #{tpu_custom_call.1} parent=1 // pred_region
      _
    $region5: #{tpu_custom_call.1} parent=1 // pred_fallthru
      _
    // Predicated region
    $region6: #{tpu_custom_call.1} parent=1 // pred_check
      _
    $region7: #{tpu_custom_call.1} parent=1 // pred_check_branch
      %15 = sbr.rel (0) target = $region9
    $region8: #{tpu_custom_call.1} parent=1 // pred_region
      _
    $region9: #{tpu_custom_call.1} parent=1 // pred_fallthru
      _
    // Predicated region
    $region10: #{tpu_custom_call.1} parent=1 // pred_check
      _
    $region11: #{tpu_custom_call.1} parent=1 // pred_check_branch
      %17 = sbr.rel (0) target = $region13
    $region12: #{tpu_custom_call.1} parent=1 // pred_region
      _
    $region13: #{tpu_custom_call.1} parent=1 // pred_fallthru
      _
    // Predicated region
    $region14: #{tpu_custom_call.1} parent=1 // pred_check
      _
    $region15: #{tpu_custom_call.1} parent=1 // pred_check_branch
      %19 = sbr.rel (0) target = $region17
    $region16: #{tpu_custom_call.1} parent=1 // pred_region
      _
    $region17: #{tpu_custom_call.1} parent=1 // pred_fallthru
      _
    // Predicated region
    $region18: #{tpu_custom_call.1} parent=1 // pred_check
      _
    $region19: #{tpu_custom_call.1} parent=1 // pred_check_branch
      %21 = sbr.rel (0) target = $region21
    $region20: #{tpu_custom_call.1} parent=1 // pred_region
      _
    $region21: #{tpu_custom_call.1} parent=1 // pred_fallthru
      _
    // Predicated region
    $region22: #{tpu_custom_call.1} parent=1 // pred_check
      _
    $region23: #{tpu_custom_call.1} parent=1 // pred_check_branch
      %23 = sbr.rel (0) target = $region25
    $region24: #{tpu_custom_call.1} parent=1 // pred_region
      _
    $region25: #{tpu_custom_call.1} parent=1 // pred_fallthru
      _
    %v25 = vld [vmem:[%s0] sm:$0xff]
    %v26 = vld [vmem:[%s0 + $0x8] sm:$0xff]
    %v27 = vld [vmem:[%s0 + $0x10] sm:$0xff]
    %v28 = vld [vmem:[%s0 + $0x18] sm:$0xff]
    %v29 = vld [vmem:[%s0 + $0x20] sm:$0xff]
    %v30 = vld [vmem:[%s0 + $0x28] sm:$0xff]
    %v31 = vld [vmem:[%s0 + $0x30] sm:$0xff]
    %v32 = vld [vmem:[%s0 + $0x38] sm:$0xff]
    %v33 = vld [vmem:[%s0 + $0x40] sm:$0xff]
    %v34 = vld [vmem:[%s0 + $0x48] sm:$0xff]
    %v35 = vld [vmem:[%s0 + $0x50] sm:$0xff]
    %v36 = vld [vmem:[%s0 + $0x58] sm:$0xff]
    %v37 = vld [vmem:[%s0 + $0x60] sm:$0xff]
    %v38 = vld [vmem:[%s0 + $0x68] sm:$0xff]
    %v39 = vld [vmem:[%s0 + $0x70] sm:$0xff]
    %v40 = vld [vmem:[%s0 + $0x78] sm:$0xff]
    %v41 = vld [vmem:[%s0 + $0x80] sm:$0xff]
    %v42 = vld [vmem:[%s0 + $0x88] sm:$0xff]
    %v43 = vld [vmem:[%s0 + $0x90] sm:$0xff]
    %v44 = vld [vmem:[%s0 + $0x98] sm:$0xff]
    %v45 = vld [vmem:[%s0 + $0xa0] sm:$0xff]
    %v46 = vld [vmem:[%s0 + $0xa8] sm:$0xff]
    %v47 = vld [vmem:[%s0 + $0xb0] sm:$0xff]
    %v48 = vld [vmem:[%s0 + $0xb8] sm:$0xff]
    %v49 = vld [vmem:[%s0 + $0xc0] sm:$0xff]
    %v50 = vpack.c.bf16 %v26, %v25
    %v51 = vpack.c.bf16 %v28, %v27
    %v52 = vpack.c.bf16 %v30, %v29
    %v53 = vpack.c.bf16 %v32, %v31
    %v54 = vpack.c.bf16 %v34, %v33
    %v55 = vpack.c.bf16 %v36, %v35
    %v56 = vpack.c.bf16 %v38, %v37
    %v57 = vpack.c.bf16 %v40, %v39
    %v58 = vpack.c.bf16 %v42, %v41
    %v59 = vpack.c.bf16 %v44, %v43
    %v60 = vpack.c.bf16 %v46, %v45
    %v61 = vpack.c.bf16 %v48, %v47
    %v62 = vpack.c.bf16 %v49, %v49
    %v63 = vld [vmem:[%s1] sm:$0xf]
    %v64 = vld [vmem:[%s1 + $0x4] sm:$0xf]
    %v65 = vld [vmem:[%s1 + $0x8] sm:$0xf]
    %v66 = vld [vmem:[%s1 + $0xc] sm:$0xf]
    %v71 = vunpack.c.l.b16 %v63
    %v72 = vunpack.c.l.b16 %v64
    %v73 = vunpack.c.l.b16 %v65
    %v74 = vunpack.c.l.b16 %v66
    %v75 = vpack.c.b16 %v72, %v71
    %v76 = vpack.c.b16 %v74, %v73
    %vm79 = vcmask 261120
    %v81 = vsel %vm79, %v50, 0
    %v84 = vsel %vm79, %v51, 0
    %v87 = vsel %vm79, %v52, 0
    %v90 = vsel %vm79, %v53, 0
    %v93 = vsel %vm79, %v54, 0
    %v96 = vsel %vm79, %v55, 0
    %v99 = vsel %vm79, %v56, 0
    %v102 = vsel %vm79, %v57, 0
    %v105 = vsel %vm79, %v58, 0
    %v108 = vsel %vm79, %v59, 0
    %v111 = vsel %vm79, %v60, 0
    %v114 = vsel %vm79, %v61, 0
    %v117 = vsel %vm79, %v62, 0
    %119 = vmatprep.subr.bf16.mxu0 0
    %120 = vmatpush1.bf16.msra.mxu0 0
    %121 = vmatprep.subr.bf16.mxu0 0
    %122 = vmatpush1.bf16.msra.mxu0 0
    %123 = vmatprep.subr.bf16.mxu0 0
    %124 = vmatpush1.bf16.msra.mxu0 0
    %125 = vmatprep.subr.bf16.mxu0 0
    %126 = vmatpush1.bf16.msra.mxu0 0
    %127 = vmatprep.subr.bf16.mxu0 0
    %128 = vmatpush1.bf16.msra.mxu0 0
    %129 = vmatprep.subr.bf16.mxu0 0
    %130 = vmatpush1.bf16.msra.mxu0 0
    %131 = vmatprep.subr.bf16.mxu0 0
    %132 = vmatpush1.bf16.msra.mxu0 %v76
    %133 = vmatprep.subr.bf16.mxu0 0
    %134 = vmatpush1.bf16.msra.mxu0 %v75
    %135 = vmatprep.subr.bf16.mxu0 0
    %136 = vmatpush2.bf16.msra.mxu0 0
    %137 = vmatprep.subr.bf16.mxu0 0
    %138 = vmatpush2.bf16.msra.mxu0 0
    %139 = vmatprep.subr.bf16.mxu0 0
    %140 = vmatpush2.bf16.msra.mxu0 0
    %141 = vmatprep.subr.bf16.mxu0 0
    %142 = vmatpush2.bf16.msra.mxu0 0
    %143 = vmatprep.subr.bf16.mxu0 0
    %144 = vmatpush2.bf16.msra.mxu0 0
    %145 = vmatprep.subr.bf16.mxu0 0
    %146 = vmatpush2.bf16.msra.mxu0 0
    %147 = vmatprep.subr.bf16.mxu0 0
    %148 = vmatpush2.bf16.msra.mxu0 0
    %149 = vmatprep.subr.bf16.mxu0 0
    %150 = vmatpush2.bf16.msra.mxu0 0
    %151 = vmatprep.mubr.bf16.mxu0 0
    %152 = vmatmul.mubr.bf16.gmra.mxu0 %v81
    %v153 = vpop.f32.mrf.mxu0
    %v154 = vadd.f32 0.0, %v153
    %v155 = vpop.f32.mrf.mxu0
    %v156 = vpop.f32.mrf.mxu0
    %v157 = vadd.f32 0.0, %v156
    %v158 = vpop.f32.mrf.mxu0
    %159 = vmatprep.mubr.bf16.mxu0 0
    %160 = vmatmul.mubr.bf16.gmra.mxu0 %v84
    %v161 = vpop.f32.mrf.mxu0
    %v162 = vadd.f32 0.0, %v161
    %v163 = vpop.f32.mrf.mxu0
    %v164 = vpop.f32.mrf.mxu0
    %v165 = vadd.f32 0.0, %v164
    %v166 = vpop.f32.mrf.mxu0
    %167 = vmatprep.mubr.bf16.mxu0 0
    %168 = vmatmul.mubr.bf16.gmra.mxu0 %v87
    %v169 = vpop.f32.mrf.mxu0
    %v170 = vadd.f32 0.0, %v169
    %v171 = vpop.f32.mrf.mxu0
    %v172 = vpop.f32.mrf.mxu0
    %v173 = vadd.f32 0.0, %v172
    %v174 = vpop.f32.mrf.mxu0
    %175 = vmatprep.mubr.bf16.mxu0 0
    %176 = vmatmul.mubr.bf16.gmra.mxu0 %v90
    %v177 = vpop.f32.mrf.mxu0
    %v178 = vadd.f32 0.0, %v177
    %v179 = vpop.f32.mrf.mxu0
    %v180 = vpop.f32.mrf.mxu0
    %v181 = vadd.f32 0.0, %v180
    %v182 = vpop.f32.mrf.mxu0
    %183 = vmatprep.mubr.bf16.mxu0 0
    %184 = vmatmul.mubr.bf16.gmra.mxu0 %v93
    %v185 = vpop.f32.mrf.mxu0
    %v186 = vadd.f32 0.0, %v185
    %v187 = vpop.f32.mrf.mxu0
    %v188 = vpop.f32.mrf.mxu0
    %v189 = vadd.f32 0.0, %v188
    %v190 = vpop.f32.mrf.mxu0
    %191 = vmatprep.mubr.bf16.mxu0 0
    %192 = vmatmul.mubr.bf16.gmra.mxu0 %v96
    %v193 = vpop.f32.mrf.mxu0
    %v194 = vadd.f32 0.0, %v193
    %v195 = vpop.f32.mrf.mxu0
    %v196 = vpop.f32.mrf.mxu0
    %v197 = vadd.f32 0.0, %v196
    %v198 = vpop.f32.mrf.mxu0
    %199 = vmatprep.mubr.bf16.mxu0 0
    %200 = vmatmul.mubr.bf16.gmra.mxu0 %v99
    %v201 = vpop.f32.mrf.mxu0
    %v202 = vadd.f32 0.0, %v201
    %v203 = vpop.f32.mrf.mxu0
    %v204 = vpop.f32.mrf.mxu0
    %v205 = vadd.f32 0.0, %v204
    %v206 = vpop.f32.mrf.mxu0
    %207 = vmatprep.mubr.bf16.mxu0 0
    %208 = vmatmul.mubr.bf16.gmra.mxu0 %v102
    %v209 = vpop.f32.mrf.mxu0
    %v210 = vadd.f32 0.0, %v209
    %v211 = vpop.f32.mrf.mxu0
    %v212 = vpop.f32.mrf.mxu0
    %v213 = vadd.f32 0.0, %v212
    %v214 = vpop.f32.mrf.mxu0
    %215 = vmatprep.mubr.bf16.mxu0 0
    %216 = vmatmul.mubr.bf16.gmra.mxu0 %v105
    %v217 = vpop.f32.mrf.mxu0
    %v218 = vadd.f32 0.0, %v217
    %v219 = vpop.f32.mrf.mxu0
    %v220 = vpop.f32.mrf.mxu0
    %v221 = vadd.f32 0.0, %v220
    %v222 = vpop.f32.mrf.mxu0
    %223 = vmatprep.mubr.bf16.mxu0 0
    %224 = vmatmul.mubr.bf16.gmra.mxu0 %v108
    %v225 = vpop.f32.mrf.mxu0
    %v226 = vadd.f32 0.0, %v225
    %v227 = vpop.f32.mrf.mxu0
    %v228 = vpop.f32.mrf.mxu0
    %v229 = vadd.f32 0.0, %v228
    %v230 = vpop.f32.mrf.mxu0
    %231 = vmatprep.mubr.bf16.mxu0 0
    %232 = vmatmul.mubr.bf16.gmra.mxu0 %v111
    %v233 = vpop.f32.mrf.mxu0
    %v234 = vadd.f32 0.0, %v233
    %v235 = vpop.f32.mrf.mxu0
    %v236 = vpop.f32.mrf.mxu0
    %v237 = vadd.f32 0.0, %v236
    %v238 = vpop.f32.mrf.mxu0
    %239 = vmatprep.mubr.bf16.mxu0 0
    %240 = vmatmul.mubr.bf16.gmra.mxu0 %v114
    %v241 = vpop.f32.mrf.mxu0
    %v242 = vadd.f32 0.0, %v241
    %v243 = vpop.f32.mrf.mxu0
    %v244 = vpop.f32.mrf.mxu0
    %v245 = vadd.f32 0.0, %v244
    %v246 = vpop.f32.mrf.mxu0
    %247 = vmatprep.mubr.bf16.mxu0 0
    %248 = vmatmul.mubr.bf16.gmra.mxu0 %v117
    %v249 = vpop.f32.mrf.mxu0
    %v250 = vadd.f32 0.0, %v249
    %v251 = vpop.f32.mrf.mxu0
    %v252 = vpop.f32.mrf.mxu0
    %v253 = vpop.f32.mrf.mxu0
    %254 = vdwg.mxu0
    %v255 = vadd.f32 %v154, %v157
    %v256 = vadd.f32 %v255, %v162
    %v257 = vadd.f32 %v256, %v165
    %v258 = vadd.f32 %v257, %v170
    %v259 = vadd.f32 %v258, %v173
    %v260 = vadd.f32 %v259, %v178
    %v261 = vadd.f32 %v260, %v181
    %v262 = vadd.f32 %v261, %v186
    %v263 = vadd.f32 %v262, %v189
    %v264 = vadd.f32 %v263, %v194
    %v265 = vadd.f32 %v264, %v197
    %v266 = vadd.f32 %v265, %v202
    %v267 = vadd.f32 %v266, %v205
    %v268 = vadd.f32 %v267, %v210
    %v269 = vadd.f32 %v268, %v213
    %v270 = vadd.f32 %v269, %v218
    %v271 = vadd.f32 %v270, %v221
    %v272 = vadd.f32 %v271, %v226
    %v273 = vadd.f32 %v272, %v229
    %v274 = vadd.f32 %v273, %v234
    %v275 = vadd.f32 %v274, %v237
    %v276 = vadd.f32 %v275, %v242
    %v277 = vadd.f32 %v276, %v245
    %v278 = vadd.f32 %v277, %v250
    %v279 = vrot.slane %v278, 4
    %v280 = vadd.f32 %v278, %v279
    %v281 = vrot.slane %v280, 2
    %v282 = vadd.f32 %v280, %v281
    %v283 = vrot.slane %v282, 1
    %v284 = vadd.f32 %v282, %v283
    %v285 = vmul.f32 %v284, 0.005
    %v286 = vmul.f32 %v154, %v154
    %v287 = vmul.f32 %v157, %v157
    %v288 = vmul.f32 %v162, %v162
    %v289 = vmul.f32 %v165, %v165
    %v290 = vmul.f32 %v170, %v170
    %v291 = vmul.f32 %v173, %v173
    %v292 = vmul.f32 %v178, %v178
    %v293 = vmul.f32 %v181, %v181
    %v294 = vmul.f32 %v186, %v186
    %v295 = vmul.f32 %v189, %v189
    %v296 = vmul.f32 %v194, %v194
    %v297 = vmul.f32 %v197, %v197
    %v298 = vmul.f32 %v202, %v202
    %v299 = vmul.f32 %v205, %v205
    %v300 = vmul.f32 %v210, %v210
    %v301 = vmul.f32 %v213, %v213
    %v302 = vmul.f32 %v218, %v218
    %v303 = vmul.f32 %v221, %v221
    %v304 = vmul.f32 %v226, %v226
    %v305 = vmul.f32 %v229, %v229
    %v306 = vmul.f32 %v234, %v234
    %v307 = vmul.f32 %v237, %v237
    %v308 = vmul.f32 %v242, %v242
    %v309 = vmul.f32 %v245, %v245
    %v310 = vmul.f32 %v250, %v250
    %v311 = vadd.f32 %v286, %v287
    %v312 = vadd.f32 %v311, %v288
    %v313 = vadd.f32 %v312, %v289
    %v314 = vadd.f32 %v313, %v290
    %v315 = vadd.f32 %v314, %v291
    %v316 = vadd.f32 %v315, %v292
    %v317 = vadd.f32 %v316, %v293
    %v318 = vadd.f32 %v317, %v294
    %v319 = vadd.f32 %v318, %v295
    %v320 = vadd.f32 %v319, %v296
    %v321 = vadd.f32 %v320, %v297
    %v322 = vadd.f32 %v321, %v298
    %v323 = vadd.f32 %v322, %v299
    %v324 = vadd.f32 %v323, %v300
    %v325 = vadd.f32 %v324, %v301
    %v326 = vadd.f32 %v325, %v302
    %v327 = vadd.f32 %v326, %v303
    %v328 = vadd.f32 %v327, %v304
    %v329 = vadd.f32 %v328, %v305
    %v330 = vadd.f32 %v329, %v306
    %v331 = vadd.f32 %v330, %v307
    %v332 = vadd.f32 %v331, %v308
    %v333 = vadd.f32 %v332, %v309
    %v334 = vadd.f32 %v333, %v310
    %v335 = vrot.slane %v334, 4
    %v336 = vadd.f32 %v334, %v335
    %v337 = vrot.slane %v336, 2
    %v338 = vadd.f32 %v336, %v337
    %v339 = vrot.slane %v338, 1
    %v340 = vadd.f32 %v338, %v339
    %v341 = vmul.f32 %v340, 0.005
    %v342 = vmul.f32 %v285, %v285
    %v343 = vsub.f32 %v341, %v342
    %v344 = vmax.f32 %v343, 0.0
    %v345 = vld [vmem:[%s2] sm:$0x1]
    %v346 = vadd.f32 %v344, 1e-05
    %v347 = vrsqrt.pop %v346
    %v348 = vmul.f32 %v345, %v347
    %v349 = vld [vmem:[%s3] sm:$0x1]
    %v350 = vmul.f32 %v285, %v348
    %v351 = vsub.f32 %v349, %v350
    %v353 = vlaneseq
    %v354 = vshrl.u32 %v353, 7
    %v355 = vsub.s32 0, %v354
    %v356 = vrot.slane %v348, %v355
    %v358 = vmul.f32 %v154, %v356
    %v359 = vmul.f32 %v157, %v356
    %v360 = vmul.f32 %v162, %v356
    %v361 = vmul.f32 %v165, %v356
    %v362 = vmul.f32 %v170, %v356
    %v363 = vmul.f32 %v173, %v356
    %v364 = vmul.f32 %v178, %v356
    %v365 = vmul.f32 %v181, %v356
    %v366 = vmul.f32 %v186, %v356
    %v367 = vmul.f32 %v189, %v356
    %v368 = vmul.f32 %v194, %v356
    %v369 = vmul.f32 %v197, %v356
    %v370 = vmul.f32 %v202, %v356
    %v371 = vmul.f32 %v205, %v356
    %v372 = vmul.f32 %v210, %v356
    %v373 = vmul.f32 %v213, %v356
    %v374 = vmul.f32 %v218, %v356
    %v375 = vmul.f32 %v221, %v356
    %v376 = vmul.f32 %v226, %v356
    %v377 = vmul.f32 %v229, %v356
    %v378 = vmul.f32 %v234, %v356
    %v379 = vmul.f32 %v237, %v356
    %v380 = vmul.f32 %v242, %v356
    %v381 = vmul.f32 %v245, %v356
    %v382 = vmul.f32 %v250, %v356
    %v384 = vlaneseq
    %v385 = vshrl.u32 %v384, 7
    %v386 = vsub.s32 0, %v385
    %v387 = vrot.slane %v351, %v386
    %v389 = vadd.f32 %v358, %v387
    %v390 = vadd.f32 %v359, %v387
    %v391 = vadd.f32 %v360, %v387
    %v392 = vadd.f32 %v361, %v387
    %v393 = vadd.f32 %v362, %v387
    %v394 = vadd.f32 %v363, %v387
    %v395 = vadd.f32 %v364, %v387
    %v396 = vadd.f32 %v365, %v387
    %v397 = vadd.f32 %v366, %v387
    %v398 = vadd.f32 %v367, %v387
    %v399 = vadd.f32 %v368, %v387
    %v400 = vadd.f32 %v369, %v387
    %v401 = vadd.f32 %v370, %v387
    %v402 = vadd.f32 %v371, %v387
    %v403 = vadd.f32 %v372, %v387
    %v404 = vadd.f32 %v373, %v387
    %v405 = vadd.f32 %v374, %v387
    %v406 = vadd.f32 %v375, %v387
    %v407 = vadd.f32 %v376, %v387
    %v408 = vadd.f32 %v377, %v387
    %v409 = vadd.f32 %v378, %v387
    %v410 = vadd.f32 %v379, %v387
    %v411 = vadd.f32 %v380, %v387
    %v412 = vadd.f32 %v381, %v387
    %v413 = vadd.f32 %v382, %v387
    %v414 = vmax.f32 %v389, 0.0
    %v415 = vmax.f32 %v390, 0.0
    %v416 = vmax.f32 %v391, 0.0
    %v417 = vmax.f32 %v392, 0.0
    %v418 = vmax.f32 %v393, 0.0
    %v419 = vmax.f32 %v394, 0.0
    %v420 = vmax.f32 %v395, 0.0
    %v421 = vmax.f32 %v396, 0.0
    %v422 = vmax.f32 %v397, 0.0
    %v423 = vmax.f32 %v398, 0.0
    %v424 = vmax.f32 %v399, 0.0
    %v425 = vmax.f32 %v400, 0.0
    %v426 = vmax.f32 %v401, 0.0
    %v427 = vmax.f32 %v402, 0.0
    %v428 = vmax.f32 %v403, 0.0
    %v429 = vmax.f32 %v404, 0.0
    %v430 = vmax.f32 %v405, 0.0
    %v431 = vmax.f32 %v406, 0.0
    %v432 = vmax.f32 %v407, 0.0
    %v433 = vmax.f32 %v408, 0.0
    %v434 = vmax.f32 %v409, 0.0
    %v435 = vmax.f32 %v410, 0.0
    %v436 = vmax.f32 %v411, 0.0
    %v437 = vmax.f32 %v412, 0.0
    %v438 = vmax.f32 %v413, 0.0
    %v439 = vpack.c.bf16 %v415, %v414
    %v440 = vpack.c.bf16 %v417, %v416
    %v441 = vpack.c.bf16 %v419, %v418
    %v442 = vpack.c.bf16 %v421, %v420
    %v443 = vpack.c.bf16 %v423, %v422
    %v444 = vpack.c.bf16 %v425, %v424
    %v445 = vpack.c.bf16 %v427, %v426
    %v446 = vpack.c.bf16 %v429, %v428
    %v447 = vpack.c.bf16 %v431, %v430
    %v448 = vpack.c.bf16 %v433, %v432
    %v449 = vpack.c.bf16 %v435, %v434
    %v450 = vpack.c.bf16 %v437, %v436
    %v451 = vpack.c.bf16 %v438, %v438
    %v452 = vld [vmem:[%s4] sm:$0xf]
    %v453 = vld [vmem:[%s4 + $0x4] sm:$0xf]
    %v454 = vld [vmem:[%s4 + $0x8] sm:$0xf]
    %v455 = vld [vmem:[%s4 + $0xc] sm:$0xf]
    %v456 = vld [vmem:[%s4 + $0x10] sm:$0xf]
    %v457 = vld [vmem:[%s4 + $0x14] sm:$0xf]
    %v458 = vld [vmem:[%s4 + $0x18] sm:$0xf]
    %v459 = vld [vmem:[%s4 + $0x1c] sm:$0xf]
    %v460 = vld [vmem:[%s4 + $0x20] sm:$0xf]
    %v461 = vld [vmem:[%s4 + $0x24] sm:$0xf]
    %v462 = vld [vmem:[%s4 + $0x28] sm:$0xf]
    %v463 = vld [vmem:[%s4 + $0x2c] sm:$0xf]
    %v464 = vld [vmem:[%s4 + $0x30] sm:$0xf]
    %v465 = vld [vmem:[%s4 + $0x34] sm:$0xf]
    %v466 = vld [vmem:[%s4 + $0x38] sm:$0xf]
    %v467 = vld [vmem:[%s4 + $0x3c] sm:$0xf]
    %v468 = vld [vmem:[%s5] sm:$0x1]
    %v470 = vlaneseq
    %v471 = vshrl.u32 %v470, 7
    %v472 = vsub.s32 0, %v471
    %v473 = vrot.slane %v468, %v472
    %v491 = vunpack.c.l.b16 %v452
    %v492 = vunpack.c.l.b16 %v453
    %v493 = vunpack.c.l.b16 %v454
    %v494 = vunpack.c.l.b16 %v455
    %v495 = vunpack.c.l.b16 %v456
    %v496 = vunpack.c.l.b16 %v457
    %v497 = vunpack.c.l.b16 %v458
    %v498 = vunpack.c.l.b16 %v459
    %v499 = vunpack.c.l.b16 %v460
    %v500 = vunpack.c.l.b16 %v461
    %v501 = vunpack.c.l.b16 %v462
    %v502 = vunpack.c.l.b16 %v463
    %v503 = vunpack.c.l.b16 %v464
    %v504 = vunpack.c.l.b16 %v465
    %v505 = vunpack.c.l.b16 %v466
    %v506 = vunpack.c.l.b16 %v467
    %v507 = vpack.c.b16 %v492, %v491
    %v508 = vpack.c.b16 %v494, %v493
    %v509 = vpack.c.b16 %v496, %v495
    %v510 = vpack.c.b16 %v498, %v497
    %v511 = vpack.c.b16 %v500, %v499
    %v512 = vpack.c.b16 %v502, %v501
    %v513 = vpack.c.b16 %v504, %v503
    %v514 = vpack.c.b16 %v506, %v505
    %523 = vmatprep.subr.bf16.mxu0 0
    %524 = vmatpush1.bf16.msra.mxu0 %v514
    %525 = vmatprep.subr.bf16.mxu0 0
    %526 = vmatpush1.bf16.msra.mxu0 %v513
    %527 = vmatprep.subr.bf16.mxu0 0
    %528 = vmatpush1.bf16.msra.mxu0 %v512
    %529 = vmatprep.subr.bf16.mxu0 0
    %530 = vmatpush1.bf16.msra.mxu0 %v511
    %531 = vmatprep.subr.bf16.mxu0 0
    %532 = vmatpush1.bf16.msra.mxu0 %v510
    %533 = vmatprep.subr.bf16.mxu0 0
    %534 = vmatpush1.bf16.msra.mxu0 %v509
    %535 = vmatprep.subr.bf16.mxu0 0
    %536 = vmatpush1.bf16.msra.mxu0 %v508
    %537 = vmatprep.subr.bf16.mxu0 0
    %538 = vmatpush1.bf16.msra.mxu0 %v507
    %539 = vmatprep.subr.bf16.mxu0 0
    %540 = vmatpush2.bf16.msra.mxu0 0
    %541 = vmatprep.subr.bf16.mxu0 0
    %542 = vmatpush2.bf16.msra.mxu0 0
    %543 = vmatprep.subr.bf16.mxu0 0
    %544 = vmatpush2.bf16.msra.mxu0 0
    %545 = vmatprep.subr.bf16.mxu0 0
    %546 = vmatpush2.bf16.msra.mxu0 0
    %547 = vmatprep.subr.bf16.mxu0 0
    %548 = vmatpush2.bf16.msra.mxu0 0
    %549 = vmatprep.subr.bf16.mxu0 0
    %550 = vmatpush2.bf16.msra.mxu0 0
    %551 = vmatprep.subr.bf16.mxu0 0
    %552 = vmatpush2.bf16.msra.mxu0 0
    %553 = vmatprep.subr.bf16.mxu0 0
    %554 = vmatpush2.bf16.msra.mxu0 0
    %555 = vmatprep.mubr.bf16.mxu0 0
    %556 = vmatmul.mubr.bf16.gmra.mxu0 %v439
    %v557 = vpop.f32.mrf.mxu0
    %v558 = vadd.f32 %v473, %v557
    %v559 = vpop.f32.mrf.mxu0
    %v560 = vpop.f32.mrf.mxu0
    %v561 = vadd.f32 %v473, %v560
    %v562 = vpop.f32.mrf.mxu0
    %563 = vmatprep.mubr.bf16.mxu0 0
    %564 = vmatmul.mubr.bf16.gmra.mxu0 %v440
    %v565 = vpop.f32.mrf.mxu0
    %v566 = vadd.f32 %v473, %v565
    %v567 = vpop.f32.mrf.mxu0
    %v568 = vpop.f32.mrf.mxu0
    %v569 = vadd.f32 %v473, %v568
    %v570 = vpop.f32.mrf.mxu0
    %571 = vmatprep.mubr.bf16.mxu0 0
    %572 = vmatmul.mubr.bf16.gmra.mxu0 %v441
    %v573 = vpop.f32.mrf.mxu0
    %v574 = vadd.f32 %v473, %v573
    %v575 = vpop.f32.mrf.mxu0
    %v576 = vpop.f32.mrf.mxu0
    %v577 = vadd.f32 %v473, %v576
    %v578 = vpop.f32.mrf.mxu0
    %579 = vmatprep.mubr.bf16.mxu0 0
    %580 = vmatmul.mubr.bf16.gmra.mxu0 %v442
    %v581 = vpop.f32.mrf.mxu0
    %v582 = vadd.f32 %v473, %v581
    %v583 = vpop.f32.mrf.mxu0
    %v584 = vpop.f32.mrf.mxu0
    %v585 = vadd.f32 %v473, %v584
    %v586 = vpop.f32.mrf.mxu0
    %587 = vmatprep.mubr.bf16.mxu0 0
    %588 = vmatmul.mubr.bf16.gmra.mxu0 %v443
    %v589 = vpop.f32.mrf.mxu0
    %v590 = vadd.f32 %v473, %v589
    %v591 = vpop.f32.mrf.mxu0
    %v592 = vpop.f32.mrf.mxu0
    %v593 = vadd.f32 %v473, %v592
    %v594 = vpop.f32.mrf.mxu0
    %595 = vmatprep.mubr.bf16.mxu0 0
    %596 = vmatmul.mubr.bf16.gmra.mxu0 %v444
    %v597 = vpop.f32.mrf.mxu0
    %v598 = vadd.f32 %v473, %v597
    %v599 = vpop.f32.mrf.mxu0
    %v600 = vpop.f32.mrf.mxu0
    %v601 = vadd.f32 %v473, %v600
    %v602 = vpop.f32.mrf.mxu0
    %603 = vmatprep.mubr.bf16.mxu0 0
    %604 = vmatmul.mubr.bf16.gmra.mxu0 %v445
    %v605 = vpop.f32.mrf.mxu0
    %v606 = vadd.f32 %v473, %v605
    %v607 = vpop.f32.mrf.mxu0
    %v608 = vpop.f32.mrf.mxu0
    %v609 = vadd.f32 %v473, %v608
    %v610 = vpop.f32.mrf.mxu0
    %611 = vmatprep.mubr.bf16.mxu0 0
    %612 = vmatmul.mubr.bf16.gmra.mxu0 %v446
    %v613 = vpop.f32.mrf.mxu0
    %v614 = vadd.f32 %v473, %v613
    %v615 = vpop.f32.mrf.mxu0
    %v616 = vpop.f32.mrf.mxu0
    %v617 = vadd.f32 %v473, %v616
    %v618 = vpop.f32.mrf.mxu0
    %619 = vmatprep.mubr.bf16.mxu0 0
    %620 = vmatmul.mubr.bf16.gmra.mxu0 %v447
    %v621 = vpop.f32.mrf.mxu0
    %v622 = vadd.f32 %v473, %v621
    %v623 = vpop.f32.mrf.mxu0
    %v624 = vpop.f32.mrf.mxu0
    %v625 = vadd.f32 %v473, %v624
    %v626 = vpop.f32.mrf.mxu0
    %627 = vmatprep.mubr.bf16.mxu0 0
    %628 = vmatmul.mubr.bf16.gmra.mxu0 %v448
    %v629 = vpop.f32.mrf.mxu0
    %v630 = vadd.f32 %v473, %v629
    %v631 = vpop.f32.mrf.mxu0
    %v632 = vpop.f32.mrf.mxu0
    %v633 = vadd.f32 %v473, %v632
    %v634 = vpop.f32.mrf.mxu0
    %635 = vmatprep.mubr.bf16.mxu0 0
    %636 = vmatmul.mubr.bf16.gmra.mxu0 %v449
    %v637 = vpop.f32.mrf.mxu0
    %v638 = vadd.f32 %v473, %v637
    %v639 = vpop.f32.mrf.mxu0
    %v640 = vpop.f32.mrf.mxu0
    %v641 = vadd.f32 %v473, %v640
    %v642 = vpop.f32.mrf.mxu0
    %643 = vmatprep.mubr.bf16.mxu0 0
    %644 = vmatmul.mubr.bf16.gmra.mxu0 %v450
    %v645 = vpop.f32.mrf.mxu0
    %v646 = vadd.f32 %v473, %v645
    %v647 = vpop.f32.mrf.mxu0
    %v648 = vpop.f32.mrf.mxu0
    %v649 = vadd.f32 %v473, %v648
    %v650 = vpop.f32.mrf.mxu0
    %651 = vmatprep.mubr.bf16.mxu0 0
    %652 = vmatmul.mubr.bf16.gmra.mxu0 %v451
    %v653 = vpop.f32.mrf.mxu0
    %v654 = vadd.f32 %v473, %v653
    %v655 = vpop.f32.mrf.mxu0
    %v656 = vpop.f32.mrf.mxu0
    %v657 = vpop.f32.mrf.mxu0
    %658 = vdwg.mxu0
    %659 = vst [vmem:[#allocation2] sm:$0xff] %v558
    %660 = vst [vmem:[#allocation2 + $0x8] sm:$0xff] %v561
    %661 = vst [vmem:[#allocation2 + $0x10] sm:$0xff] %v566
    %662 = vst [vmem:[#allocation2 + $0x18] sm:$0xff] %v569
    %663 = vst [vmem:[#allocation2 + $0x20] sm:$0xff] %v574
    %664 = vst [vmem:[#allocation2 + $0x28] sm:$0xff] %v577
    %665 = vst [vmem:[#allocation2 + $0x30] sm:$0xff] %v582
    %666 = vst [vmem:[#allocation2 + $0x38] sm:$0xff] %v585
    %667 = vst [vmem:[#allocation2 + $0x40] sm:$0xff] %v590
    %668 = vst [vmem:[#allocation2 + $0x48] sm:$0xff] %v593
    %669 = vst [vmem:[#allocation2 + $0x50] sm:$0xff] %v598
    %670 = vst [vmem:[#allocation2 + $0x58] sm:$0xff] %v601
    %671 = vst [vmem:[#allocation2 + $0x60] sm:$0xff] %v606
    %672 = vst [vmem:[#allocation2 + $0x68] sm:$0xff] %v609
    %673 = vst [vmem:[#allocation2 + $0x70] sm:$0xff] %v614
    %674 = vst [vmem:[#allocation2 + $0x78] sm:$0xff] %v617
    %675 = vst [vmem:[#allocation2 + $0x80] sm:$0xff] %v622
    %676 = vst [vmem:[#allocation2 + $0x88] sm:$0xff] %v625
    %677 = vst [vmem:[#allocation2 + $0x90] sm:$0xff] %v630
    %678 = vst [vmem:[#allocation2 + $0x98] sm:$0xff] %v633
    %679 = vst [vmem:[#allocation2 + $0xa0] sm:$0xff] %v638
    %680 = vst [vmem:[#allocation2 + $0xa8] sm:$0xff] %v641
    %681 = vst [vmem:[#allocation2 + $0xb0] sm:$0xff] %v646
    %682 = vst [vmem:[#allocation2 + $0xb8] sm:$0xff] %v649
    %683 = vst [vmem:[#allocation2 + $0xc0] sm:$0xff] %v654
    // Predicated region
    $region26: #{tpu_custom_call.1} parent=1 // pred_check
      _
    $region27: #{tpu_custom_call.1} parent=1 // pred_check_branch
      %685 = sbr.rel (0) target = $region29
    $region28: #{tpu_custom_call.1} parent=1 // pred_region
      %s687 = ssub.s32 3200, 3200
      %688 = vsyncadd [#allocation3], %s687
      %s689 = sshll.u32 [#allocation2], 4
      %s690 = int_to_ptr.vmem [resolvable:$true] %s689
      %695 = dma.vmem_to_hbm [thread:$0]  %s690, 3200, %s6, [#allocation3], 128, 128, 8
    $region29: #{tpu_custom_call.1} parent=1 // pred_fallthru
      _
    // Predicated region
    $region30: #{tpu_custom_call.1} parent=1 // pred_check
      _
    $region31: #{tpu_custom_call.1} parent=1 // pred_check_branch
      %697 = sbr.rel (0) target = $region33
    $region32: #{tpu_custom_call.1} parent=1 // pred_region
      %698 = dma.done [#allocation3], 3200
    $region33: #{tpu_custom_call.1} parent=1 // pred_fallthru
      _
    %699 = vsyncpa [#allocation3], 1

</llo_original>
